<compile_context>
chip_gen: v5e
topology: v5e:2x2
jax: 0.10.0
libtpu: 0.0.40
codegen_flags: <defaults>
</compile_context>

<pallas_src>
import functools
import math

import jax
import jax.numpy as jnp
from jax.experimental import pallas as pl
from jax.experimental.pallas import tpu as pltpu


def _pe_kernel(seed_ref, x_ref, pe_ref, o_ref, *, p_drop, training):
    # seed_ref: (1,) int32 in SMEM (scalar prefetch)
    # x_ref:    (tS, B, D) tile in VMEM
    # pe_ref:   (tS, 1, D) tile in VMEM  (broadcasts over batch)
    x = x_ref[...]
    pe = pe_ref[...].astype(x.dtype)
    y = x + pe                                   # broadcast add over batch axis

    if training and p_drop > 0.0:
        tS, B, D = y.shape
        # Unique per-element counter inside this tile.
        s_idx = jax.lax.broadcasted_iota(jnp.int32, y.shape, 0).astype(jnp.uint32)
        b_idx = jax.lax.broadcasted_iota(jnp.int32, y.shape, 1).astype(jnp.uint32)
        d_idx = jax.lax.broadcasted_iota(jnp.int32, y.shape, 2).astype(jnp.uint32)
        idx = (s_idx * jnp.uint32(B) + b_idx) * jnp.uint32(D) + d_idx

        # Mix in the user seed and the grid position so every tile (and every
        # TensorCore on v7x) gets an independent dropout mask.
        tile_id = pl.program_id(0).astype(jnp.uint32)
        seed = seed_ref[0].astype(jnp.uint32)
        h = idx ^ (seed * jnp.uint32(0x9E3779B9) + tile_id * jnp.uint32(0x85EBCA77))
        # Murmur3-style finalizer: cheap VPU-only integer mixing.
        h = h * jnp.uint32(0xCC9E2D51)
        h = h ^ (h >> 15)
        h = h * jnp.uint32(0x1B873593)
        h = h ^ (h >> 13)
        h = h * jnp.uint32(0xC2B2AE35)
        h = h ^ (h >> 16)

        # Keep with probability (1 - p): compare top 24 uniform bits.
        thresh = jnp.uint32(int(round((1.0 - p_drop) * (1 << 24))))
        keep = (h >> 8) < thresh
        scale = jnp.asarray(1.0 / (1.0 - p_drop), dtype=y.dtype)
        y = jnp.where(keep, y * scale, jnp.zeros_like(y))

    o_ref[...] = y.astype(o_ref.dtype)


def make_pe_table(d_model, max_len=5000, dtype=jnp.float32):
    """Deterministic sin/cos positional-encoding buffer, shape (max_len, 1, d_model)."""
    position = jnp.arange(max_len, dtype=jnp.float32)[:, None]            # (L, 1)
    div_term = jnp.exp(
        jnp.arange(0, d_model, 2, dtype=jnp.float32) * (-math.log(10000.0) / d_model)
    )                                                                     # (D/2,)
    pe = jnp.zeros((max_len, d_model), dtype=jnp.float32)
    pe = pe.at[:, 0::2].set(jnp.sin(position * div_term))
    pe = pe.at[:, 1::2].set(jnp.cos(position * div_term))
    return pe[:, None, :].astype(dtype)                                   # (L, 1, D)


def positional_encoding(x, pe_table, *, p_drop=0.1, training=False, seed=0,
                        tile_seq=None):
    """x: (S, B, D).  Returns dropout(x + pe[:S]) computed inside one Pallas kernel."""
    S, B, D = x.shape
    pe_slice = pe_table[:S].astype(x.dtype)                               # (S, 1, D)
    seed_arr = jnp.array([seed], dtype=jnp.int32)

    itemsize = jnp.dtype(x.dtype).itemsize
    if tile_seq is None:
        # ~2 MiB per x tile: with double-buffered x-in + out tiles (plus the small
        # pe tile) that is < 10 MiB live VMEM — safe on all of v5e/v6e/v7x default
        # scoped-VMEM limits, while large enough to sit near the HBM roofline.
        target_bytes = 2 * 1024 * 1024
        rows = max(1, target_bytes // max(1, B * D * itemsize))
        if rows >= 8:
            rows = (rows // 8) * 8          # sublane-friendly row count
        tile_seq = min(S, rows)
    tS = int(tile_seq)
    grid = (pl.cdiv(S, tS),)

    kernel = functools.partial(
        _pe_kernel, p_drop=float(p_drop), training=bool(training))

    # Advisory cost hint for XLA's scheduler (mem-bound elementwise op).
    bytes_accessed = int((2 * S * B * D + S * D) * itemsize)
    cost = pl.CostEstimate(flops=int(S * B * D), transcendentals=0,
                           bytes_accessed=bytes_accessed)

    # TODO(synk): optionally alias x to the output (input_output_aliases) when the
    # caller does not need x afterwards; left off here because the demo re-reads x.
    return pl.pallas_call(
        kernel,
        out_shape=jax.ShapeDtypeStruct((S, B, D), x.dtype),
        grid_spec=pltpu.PrefetchScalarGridSpec(
            num_scalar_prefetch=1,                       # seed -> SMEM
            grid=grid,
            in_specs=[
                # x tile: stream the sequence axis, keep full (B, D) trailing dims
                pl.BlockSpec((tS, B, D), lambda i, seed_ref: (i, 0, 0)),
                # matching pe tile (broadcasts over batch inside the kernel)
                pl.BlockSpec((tS, 1, D), lambda i, seed_ref: (i, 0, 0)),
            ],
            out_specs=pl.BlockSpec((tS, B, D), lambda i, seed_ref: (i, 0, 0)),
        ),
        compiler_params=pltpu.CompilerParams(
            dimension_semantics=("parallel",),           # shard across TCs on v7x
        ),
        cost_estimate=cost,
    )(seed_arr, x, pe_slice)


if __name__ == "__main__":
    # Small shapes implied by the forward: seq=8, batch=2, d_model=32
    S, B, D = 8, 2, 32
    key = jax.random.PRNGKey(0)
    x = jax.random.normal(key, (S, B, D), dtype=jnp.float32)

    pe_table = make_pe_table(D, max_len=5000)

    # Eval mode (dropout = identity), checked against a pure-JAX reference.
    out_eval = positional_encoding(x, pe_table, p_drop=0.1, training=False)
    out_eval = jax.block_until_ready(out_eval)
    ref = x + pe_table[:S]
    assert out_eval.shape == (S, B, D)
    assert jnp.allclose(out_eval, ref, atol=1e-5, rtol=1e-5), "eval-mode mismatch"

    # Training mode path (exercises in-kernel stateless-hash dropout).
    out_train = positional_encoding(x, pe_table, p_drop=0.1, training=True, seed=1234)
    out_train = jax.block_until_ready(out_train)
    assert out_train.shape == (S, B, D)
    # Every element is either exactly 0 or (x+pe)/(1-p)
    scaled = ref / (1.0 - 0.1)
    ok = jnp.isclose(out_train, 0.0, atol=1e-6) | jnp.isclose(
        out_train, scaled, atol=1e-4, rtol=1e-4)
    assert bool(jnp.all(ok)), "train-mode dropout semantics mismatch"
    n_drop = int(jnp.sum(out_train == 0.0))
    assert 0 < n_drop < out_train.size, "dropout mask degenerate"

    print("KERNEL_OK")
</pallas_src>

<mosaic_0001>
module attributes {stable_mosaic.version = 11 : i64} {
  func.func @_pe_kernel(%arg0: i32, %arg1: memref<1xi32, #tpu.memory_space<smem>>, %arg2: memref<8x2x32xf32, #tpu.memory_space<vmem>>, %arg3: memref<8x1x32xf32, #tpu.memory_space<vmem>>, %arg4: memref<8x2x32xf32, #tpu.memory_space<vmem>>) attributes {dimension_semantics = [#tpu.dimension_semantics<parallel>], iteration_bounds = array<i64: 1>, scalar_prefetch = 1 : i64, scratch_operands = 0 : i64, tpu.core_type = #tpu.core_type<tc>, window_params = [{transform_indices = @transform_0, window_bounds = array<i64: 8, 2, 32>}, {transform_indices = @transform_1, window_bounds = array<i64: 8, 1, 32>}, {transform_indices = @transform_2, window_bounds = array<i64: 8, 2, 32>}]} {
    %c0 = arith.constant 0 : index
    %c0_0 = arith.constant 0 : index
    %c0_1 = arith.constant 0 : index
    %0 = vector.load %arg2[%c0, %c0_0, %c0_1] : memref<8x2x32xf32, #tpu.memory_space<vmem>>, vector<8x2x32xf32>
    %c0_2 = arith.constant 0 : index
    %c0_3 = arith.constant 0 : index
    %c0_4 = arith.constant 0 : index
    %1 = vector.load %arg3[%c0_2, %c0_3, %c0_4] : memref<8x1x32xf32, #tpu.memory_space<vmem>>, vector<8x1x32xf32>
    %2 = vector.broadcast %1 : vector<8x1x32xf32> to vector<8x2x32xf32>
    %3 = arith.addf %0, %2 : vector<8x2x32xf32>
    %c0_5 = arith.constant 0 : index
    %c0_6 = arith.constant 0 : index
    %c0_7 = arith.constant 0 : index
    %4 = vector.load %arg4[%c0_5, %c0_6, %c0_7] : memref<8x2x32xf32, #tpu.memory_space<vmem>>, vector<8x2x32xf32>
    tpu.vector_store %arg4[%c0_5, %c0_6, %c0_7], %3 {strides = array<i32>} : memref<8x2x32xf32, #tpu.memory_space<vmem>>, vector<8x2x32xf32>,
    return
  }
  func.func @transform_0(%arg0: i32, %arg1: memref<1xi32, #tpu.memory_space<smem>>) -> (i32, i32, i32) {
    %c0_i32 = arith.constant 0 : i32
    %c0_i32_0 = arith.constant 0 : i32
    %c0_i32_1 = arith.constant 0 : i32
    return %arg0, %c0_i32, %c0_i32_0 : i32, i32, i32
  }
  func.func @transform_1(%arg0: i32, %arg1: memref<1xi32, #tpu.memory_space<smem>>) -> (i32, i32, i32) {
    %c0_i32 = arith.constant 0 : i32
    %c0_i32_0 = arith.constant 0 : i32
    %c0_i32_1 = arith.constant 0 : i32
    return %arg0, %c0_i32, %c0_i32_0 : i32, i32, i32
  }
  func.func @transform_2(%arg0: i32, %arg1: memref<1xi32, #tpu.memory_space<smem>>) -> (i32, i32, i32) {
    %c0_i32 = arith.constant 0 : i32
    %c0_i32_0 = arith.constant 0 : i32
    %c0_i32_1 = arith.constant 0 : i32
    return %arg0, %c0_i32, %c0_i32_0 : i32, i32, i32
  }
}

</mosaic_0001>

<llo_original>
// kernel: tpu_custom_call.1
$region0: #{tpu_custom_call.1}
  #allocation0 [shape = 'u32[]', space=smem, size = 0x4, offset = 0x4, fixed_abs, tag = 'smem constant byte address 0x4 - core index']
  #allocation1 [shape = 'u32[72,128]{1,0:T(1,128)}', space=vmem, size = 0x9000, scoped, tag = 'internal scratch']
  #allocation2 [shape = 's32[1]{0}', space=sflag, size = 0x4, scoped, tag = 'scoped memory for tpu_custom_call.1']
  #allocation3 [shape = 's32[1]{0:T(128)S(6)}', space=smem, size = 0x200, scoped, tag = 'prefetched SMEM operand 0']
  %s0 = inlined_call_operand.<no memory space> [shape: s32[1], index: 0, kind: input, shape index: {}]
  %s1 = inlined_call_operand.hbm [shape: f32[8,2,32], index: 1, kind: input, shape index: {}]
  %s2 = inlined_call_operand.hbm [shape: f32[8,1,32], index: 2, kind: input, shape index: {}]
  %s3 = inlined_call_operand.hbm [shape: f32[8,2,32], index: 3, kind: output, shape index: {}]
  %s4 = sld [smem:[#allocation0]]
  $region26: #{tpu_custom_call.1} parent=0
    _
  %s6 = ssub.s32 1, %s4
  %s7 = scalar_select 0, %s6, %s4
  %8 = sst [smem:[#allocation3]] %s0
  $region1: #{tpu_custom_call.1} parent=0
    #allocation4 [shape = 'u8[8192]{0}', space=vmem, size = 0x2000, scoped, tag = 'input window, operand 1, single buffered']
    #allocation5 [shape = 's32[1]{0}', space=sflag, size = 0x4, scoped, tag = 'scoped memory for tpu_custom_call.1']
    #allocation6 [shape = 's32[1]{0}', space=sflag, size = 0x4, scoped, tag = 'scoped memory for tpu_custom_call.1']
    #allocation7 [shape = 'u8[4096]{0}', space=vmem, size = 0x1000, scoped, tag = 'input window, operand 2, single buffered']
    #allocation8 [shape = 's32[1]{0}', space=sflag, size = 0x4, scoped, tag = 'scoped memory for tpu_custom_call.1']
    #allocation9 [shape = 'u8[8192]{0}', space=vmem, size = 0x2000, scoped, tag = 'output window, operand 0, single buffered']
    %9 = vsyncpa [#allocation5], 0
    %10 = vsyncpa [#allocation8], 0
    %11 = vsyncpa [#allocation6], 0
    // Predicated region
    $region2: #{tpu_custom_call.1} parent=1 // pred_check
      _
    $region3: #{tpu_custom_call.1} parent=1 // pred_check_branch
      %13 = sbr.rel (0) target = $region5
    $region4: #{tpu_custom_call.1} parent=1 // pred_region
      %15 = vsyncadd [#allocation5], 0
      %s16 = sshll.u32 %s1, 4
      %s17 = int_to_ptr.hbm [resolvable:$true] %s16
      %s18 = sshll.u32 [#allocation4], 4
      %s19 = int_to_ptr.vmem [resolvable:$true] %s18
      %24 = dma.hbm_to_vmem [thread:$0]  %s17, 256, %s19, [#allocation5], 32, 32, 2
    $region5: #{tpu_custom_call.1} parent=1 // pred_fallthru
      _
    // Predicated region
    $region6: #{tpu_custom_call.1} parent=1 // pred_check
      _
    $region7: #{tpu_custom_call.1} parent=1 // pred_check_branch
      %26 = sbr.rel (0) target = $region9
    $region8: #{tpu_custom_call.1} parent=1 // pred_region
      %28 = vsyncadd [#allocation8], 0
      %s29 = sshll.u32 %s2, 4
      %s30 = int_to_ptr.hbm [resolvable:$true] %s29
      %s31 = sshll.u32 [#allocation7], 4
      %s32 = int_to_ptr.vmem [resolvable:$true] %s31
      %37 = dma.hbm_to_vmem [thread:$0]  %s30, 128, %s32, [#allocation8], 16, 16, 1
    $region9: #{tpu_custom_call.1} parent=1 // pred_fallthru
      _
    // Predicated region
    $region10: #{tpu_custom_call.1} parent=1 // pred_check
      _
    $region11: #{tpu_custom_call.1} parent=1 // pred_check_branch
      %39 = sbr.rel (0) target = $region13
    $region12: #{tpu_custom_call.1} parent=1 // pred_region
      %41 = dma.done [#allocation5], 256
    $region13: #{tpu_custom_call.1} parent=1 // pred_fallthru
      _
    // Predicated region
    $region14: #{tpu_custom_call.1} parent=1 // pred_check
      _
    $region15: #{tpu_custom_call.1} parent=1 // pred_check_branch
      %43 = sbr.rel (0) target = $region17
    $region16: #{tpu_custom_call.1} parent=1 // pred_region
      %45 = dma.done [#allocation8], 128
    $region17: #{tpu_custom_call.1} parent=1 // pred_fallthru
      _
    %v46 = vld [vmem:[#allocation4] sm:$0x3]
    %v47 = vld [vmem:[#allocation4 + $0x2] sm:$0x3]
    %v48 = vld [vmem:[#allocation4 + $0x4] sm:$0x3]
    %v49 = vld [vmem:[#allocation4 + $0x6] sm:$0x3]
    %v50 = vld [vmem:[#allocation4 + $0x8] sm:$0x3]
    %v51 = vld [vmem:[#allocation4 + $0xa] sm:$0x3]
    %v52 = vld [vmem:[#allocation4 + $0xc] sm:$0x3]
    %v53 = vld [vmem:[#allocation4 + $0xe] sm:$0x3]
    %v54 = vld [vmem:[#allocation7] sm:$0x1]
    %v55 = vld [vmem:[#allocation7 + $0x1] sm:$0x1]
    %v56 = vld [vmem:[#allocation7 + $0x2] sm:$0x1]
    %v57 = vld [vmem:[#allocation7 + $0x3] sm:$0x1]
    %v58 = vld [vmem:[#allocation7 + $0x4] sm:$0x1]
    %v59 = vld [vmem:[#allocation7 + $0x5] sm:$0x1]
    %v60 = vld [vmem:[#allocation7 + $0x6] sm:$0x1]
    %v61 = vld [vmem:[#allocation7 + $0x7] sm:$0x1]
    %v70 = vperm.slane %v54, 0
    %v71 = vperm.slane %v55, 0
    %v72 = vperm.slane %v56, 0
    %v73 = vperm.slane %v57, 0
    %v74 = vperm.slane %v58, 0
    %v75 = vperm.slane %v59, 0
    %v76 = vperm.slane %v60, 0
    %v77 = vperm.slane %v61, 0
    %v86 = vadd.f32 %v46, %v70
    %v87 = vadd.f32 %v47, %v71
    %v88 = vadd.f32 %v48, %v72
    %v89 = vadd.f32 %v49, %v73
    %v90 = vadd.f32 %v50, %v74
    %v91 = vadd.f32 %v51, %v75
    %v92 = vadd.f32 %v52, %v76
    %v93 = vadd.f32 %v53, %v77
    %vm94 = vcmask 254976
    %95 = vst.msk [vmem:[#allocation9] sm:$0x3] %vm94, %v86
    %96 = vst.msk [vmem:[#allocation9 + $0x2] sm:$0x3] %vm94, %v87
    %97 = vst.msk [vmem:[#allocation9 + $0x4] sm:$0x3] %vm94, %v88
    %98 = vst.msk [vmem:[#allocation9 + $0x6] sm:$0x3] %vm94, %v89
    %99 = vst.msk [vmem:[#allocation9 + $0x8] sm:$0x3] %vm94, %v90
    %100 = vst.msk [vmem:[#allocation9 + $0xa] sm:$0x3] %vm94, %v91
    %101 = vst.msk [vmem:[#allocation9 + $0xc] sm:$0x3] %vm94, %v92
    %102 = vst.msk [vmem:[#allocation9 + $0xe] sm:$0x3] %vm94, %v93
    // Predicated region
    $region18: #{tpu_custom_call.1} parent=1 // pred_check
      _
    $region19: #{tpu_custom_call.1} parent=1 // pred_check_branch
      %104 = sbr.rel (0) target = $region21
    $region20: #{tpu_custom_call.1} parent=1 // pred_region
      %106 = vsyncadd [#allocation6], 0
      %s107 = sshll.u32 [#allocation9], 4
      %s108 = int_to_ptr.vmem [resolvable:$true] %s107
      %s109 = sshll.u32 %s3, 4
      %s110 = int_to_ptr.hbm [resolvable:$true] %s109
      %115 = dma.vmem_to_hbm [thread:$0]  %s108, 256, %s110, [#allocation6], 32, 32, 2
    $region21: #{tpu_custom_call.1} parent=1 // pred_fallthru
      _
    // Predicated region
    $region22: #{tpu_custom_call.1} parent=1 // pred_check
      _
    $region23: #{tpu_custom_call.1} parent=1 // pred_check_branch
      %117 = sbr.rel (0) target = $region25
    $region24: #{tpu_custom_call.1} parent=1 // pred_region
      %119 = dma.done [#allocation6], 256
    $region25: #{tpu_custom_call.1} parent=1 // pred_fallthru
      _
    %120 = vsyncpa [#allocation5], 1
    %121 = vsyncpa [#allocation8], 1
    %122 = vsyncpa [#allocation6], 1

</llo_original>
